<compile_context>
chip_gen: v7x
topology: tpu7x:2x2x1
jax: 0.10.0
libtpu: 0.0.40
codegen_flags: <defaults>
</compile_context>

<pallas_src>
import functools
import math

import jax
import jax.numpy as jnp
import numpy as np
from jax.experimental import pallas as pl
from jax.experimental.pallas import tpu as pltpu


def mha_kernel(x_ref, wqkv_ref, bqkv_ref, wo_ref, bo_ref, o_ref,
               qkv_sc, vals_sc, *, n_heads):
    """Grid = (batch,). One step computes all heads for one batch element."""
    S = x_ref.shape[1]
    E = x_ref.shape[2]
    H = n_heads
    hd = E // H

    x = x_ref[0]                                              # (S, E) bf16

    # Fused QKV projection for all heads: bf16 MXU operands, f32 accumulation,
    # N = 3E lanes.  1/sqrt(hd) is pre-folded into the Q columns (wrapper), so
    # no logit scaling is needed below.  Result parked in a VMEM scratch so the
    # per-head (S, hd) tiles are cheap lane-offset VMEM loads.
    qkv_sc[...] = jnp.dot(x, wqkv_ref[...],
                          preferred_element_type=jnp.float32) + bqkv_ref[...]

    # Per-head scaled-dot-product attention, all heads unrolled inside this one
    # grid step (column order is the module-native [h: q|k|v] layout).
    for h in range(H):
        base = h * 3 * hd
        qh = qkv_sc[:, base:base + hd].astype(jnp.bfloat16)              # (S, hd)
        kh = qkv_sc[:, base + hd:base + 2 * hd].astype(jnp.bfloat16)     # (S, hd)
        vh = qkv_sc[:, base + 2 * hd:base + 3 * hd].astype(jnp.bfloat16)

        # q @ k^T (already scaled via the folded weight)
        logits = jax.lax.dot_general(
            qh, kh, (((1,), (1,)), ((), ())),
            preferred_element_type=jnp.float32)                          # (S, S) f32

        # numerically-stable softmax in f32; denominator on the EUP
        logits = logits - jnp.max(logits, axis=-1, keepdims=True)
        p = jnp.exp(logits)
        attn = p * pl.reciprocal(jnp.sum(p, axis=-1, keepdims=True), approx=True)

        # TODO(synk): training-mode dropout on `attn` omitted (eval = identity).
        vals_sc[:, h * hd:(h + 1) * hd] = jnp.dot(
            attn.astype(jnp.bfloat16), vh, preferred_element_type=jnp.float32)

    # Single fused output projection over all heads: (S, E) @ (E, E).
    out = jnp.dot(vals_sc[...].astype(jnp.bfloat16), wo_ref[...],
                  preferred_element_type=jnp.float32) + bo_ref[...]
    o_ref[0] = out.astype(o_ref.dtype)


def multi_head_attention(x, wqkv, bqkv, wo, bo, *, n_heads):
    """x: (B, S, E); wqkv: (3E, E); bqkv: (3E,); wo: (E, E); bo: (E,).

    Weights are given in PyTorch nn.Linear layout (out, in); the wrapper
    transposes to (in, out), folds the attention scale into the Q columns and
    casts MXU operands to bf16.
    """
    B, S, E = x.shape
    assert E % n_heads == 0
    H = n_heads
    hd = E // H
    scale = 1.0 / math.sqrt(hd)

    # per-output-column scale: 1/sqrt(hd) on the q columns of every head,
    # 1 on the k/v columns (module-native column order [h: q|k|v]).
    col_scale = jnp.tile(
        jnp.concatenate([jnp.full((hd,), scale, jnp.float32),
                         jnp.ones((2 * hd,), jnp.float32)]), H)            # (3E,)

    wqkv_t = (wqkv.astype(jnp.float32).T * col_scale[None, :]).astype(jnp.bfloat16)  # (E, 3E)
    bqkv_2d = (bqkv.astype(jnp.float32) * col_scale).reshape(1, 3 * E)               # (1, 3E) f32
    wo_t = wo.astype(jnp.float32).T.astype(jnp.bfloat16)                              # (E, E)
    bo_2d = bo.astype(jnp.float32).reshape(1, E)                                      # (1, E) f32
    x_bf = x.astype(jnp.bfloat16)

    kernel = functools.partial(mha_kernel, n_heads=H)

    # Scoped-VMEM budget from the actual resident set; cap well below the
    # smallest physical VMEM across generations (64 MiB/TC on v7x).
    resident = (
        2 * S * E * 2            # x block (bf16), double-buffered
        + 2 * E * 3 * E * 2      # packed Wqkv (bf16), double-buffered
        + 2 * 3 * E * 4          # packed qkv bias (f32)
        + 2 * E * E * 2          # Wo (bf16), double-buffered
        + 2 * E * 4              # output bias (f32)
        + 2 * S * E * 4          # output block (f32), double-buffered
        + S * 3 * E * 4          # qkv scratch (f32)
        + S * E * 4              # head-output scratch (f32)
        + 8 * S * S * 4          # softmax / matmul temporaries (generous)
    )
    try:
        info = pltpu.get_tpu_info()
        vmem_cap = int(getattr(info, "vmem_capacity_bytes", 64 * 1024 * 1024))
    except Exception:
        vmem_cap = 64 * 1024 * 1024
    vmem_limit = int(min(max(8 * resident, 4 * 1024 * 1024), (3 * vmem_cap) // 4))

    return pl.pallas_call(
        kernel,
        out_shape=jax.ShapeDtypeStruct((B, S, E), x.dtype),
        grid=(B,),
        in_specs=[
            pl.BlockSpec((1, S, E), lambda b: (b, 0, 0)),     # x: one batch row
            pl.BlockSpec((E, 3 * E), lambda b: (0, 0)),       # packed Wqkv (whole)
            pl.BlockSpec((1, 3 * E), lambda b: (0, 0)),       # packed qkv bias
            pl.BlockSpec((E, E), lambda b: (0, 0)),           # Wo (whole)
            pl.BlockSpec((1, E), lambda b: (0, 0)),           # output bias
        ],
        out_specs=pl.BlockSpec((1, S, E), lambda b: (b, 0, 0)),
        scratch_shapes=[pltpu.VMEM((S, 3 * E), jnp.float32),  # fused qkv
                        pltpu.VMEM((S, E), jnp.float32)],     # per-head outputs
        compiler_params=pltpu.CompilerParams(
            dimension_semantics=("parallel",),                # v7x: 2 TCs split batch
            vmem_limit_bytes=vmem_limit),
    )(x_bf, wqkv_t, bqkv_2d, wo_t, bo_2d)


def reference_mha(x, wqkv, bqkv, wo, bo, *, n_heads):
    """Pure-JAX mirror of the PyTorch forward (memory=None, mask=None, eval)."""
    B, S, E = x.shape
    hd = E // n_heads
    qkv = jnp.einsum('bse,oe->bso', x, wqkv) + bqkv            # (B, S, 3E)
    qkv = qkv.reshape(B, S, n_heads, 3 * hd).transpose(0, 2, 1, 3)
    q, k, v = jnp.split(qkv, 3, axis=-1)                       # (B, H, S, hd)
    logits = jnp.einsum('bhsd,bhtd->bhst', q, k) / math.sqrt(hd)
    attn = jax.nn.softmax(logits, axis=-1)
    vals = jnp.einsum('bhst,bhtd->bhsd', attn, v)
    vals = vals.transpose(0, 2, 1, 3).reshape(B, S, E)
    return jnp.einsum('bse,oe->bso', vals, wo) + bo


def xavier_uniform(key, shape, fan_in, fan_out, dtype=jnp.float32):
    limit = math.sqrt(6.0 / (fan_in + fan_out))
    return jax.random.uniform(key, shape, dtype, minval=-limit, maxval=limit)


if __name__ == "__main__":
    # small shapes consistent with the module: batch=2, seq=8, embed=32, heads=4
    B, S, E, H = 2, 8, 32, 4

    key = jax.random.PRNGKey(0)
    kx, kqkv, ko = jax.random.split(key, 3)

    x = jax.random.normal(kx, (B, S, E), dtype=jnp.float32)

    # deterministic parameter init matching _reset_parameters():
    #   xavier_uniform weights, zero biases
    wqkv = xavier_uniform(kqkv, (3 * E, E), fan_in=E, fan_out=3 * E)
    bqkv = jnp.zeros((3 * E,), jnp.float32)
    wo = xavier_uniform(ko, (E, E), fan_in=E, fan_out=E)
    bo = jnp.zeros((E,), jnp.float32)

    out = multi_head_attention(x, wqkv, bqkv, wo, bo, n_heads=H)
    out = jax.block_until_ready(out)

    ref = reference_mha(x, wqkv, bqkv, wo, bo, n_heads=H)
    # bf16 MXU operands + approx reciprocal => ~1e-3..1e-2 relative error budget
    np.testing.assert_allclose(np.asarray(out), np.asarray(ref),
                               rtol=2e-2, atol=2e-2)
    print("KERNEL_OK")
</pallas_src>

<mosaic_0001>
module attributes {stable_mosaic.version = 11 : i64} {
  func.func @mha_kernel(%arg0: i32, %arg1: memref<1x8x32xbf16, #tpu.memory_space<vmem>>, %arg2: memref<32x96xbf16, #tpu.memory_space<vmem>>, %arg3: memref<1x96xf32, #tpu.memory_space<vmem>>, %arg4: memref<32x32xbf16, #tpu.memory_space<vmem>>, %arg5: memref<1x32xf32, #tpu.memory_space<vmem>>, %arg6: memref<1x8x32xf32, #tpu.memory_space<vmem>>, %arg7: memref<8x96xf32, #tpu.memory_space<vmem>>, %arg8: memref<8x32xf32, #tpu.memory_space<vmem>>) attributes {dimension_semantics = [#tpu.dimension_semantics<parallel>], iteration_bounds = array<i64: 2>, scalar_prefetch = 0 : i64, scratch_operands = 2 : i64, tpu.core_type = #tpu.core_type<tc>, window_params = [{transform_indices = @transform_0, window_bounds = array<i64: 1, 8, 32>}, {pipeline_mode = #tpu.pipeline_mode<synchronous>, transform_indices = @transform_1, window_bounds = array<i64: 32, 96>}, {pipeline_mode = #tpu.pipeline_mode<synchronous>, transform_indices = @transform_2, window_bounds = array<i64: 1, 96>}, {pipeline_mode = #tpu.pipeline_mode<synchronous>, transform_indices = @transform_3, window_bounds = array<i64: 32, 32>}, {pipeline_mode = #tpu.pipeline_mode<synchronous>, transform_indices = @transform_4, window_bounds = array<i64: 1, 32>}, {transform_indices = @transform_5, window_bounds = array<i64: 1, 8, 32>}]} {
    %c0 = arith.constant 0 : index
    %c0_0 = arith.constant 0 : index
    %c0_1 = arith.constant 0 : index
    %0 = vector.load %arg1[%c0, %c0_0, %c0_1] : memref<1x8x32xbf16, #tpu.memory_space<vmem>>, vector<1x8x32xbf16>
    %1 = vector.shape_cast %0 : vector<1x8x32xbf16> to vector<8x32xbf16>
    %c0_2 = arith.constant 0 : index
    %c0_3 = arith.constant 0 : index
    %2 = vector.load %arg2[%c0_2, %c0_3] : memref<32x96xbf16, #tpu.memory_space<vmem>>, vector<32x96xbf16>
    %cst = arith.constant dense<0.000000e+00> : vector<8x96xf32>
    %3 = tpu.matmul %1, %2, %cst {dimension_numbers = #tpu.dot_dimension_numbers<[1], [0], [0], [1], [0, 0, 1, 1], [], []>} : vector<8x32xbf16>, vector<32x96xbf16>, vector<8x96xf32> -> vector<8x96xf32>
    %c0_4 = arith.constant 0 : index
    %c0_5 = arith.constant 0 : index
    %4 = vector.load %arg3[%c0_4, %c0_5] : memref<1x96xf32, #tpu.memory_space<vmem>>, vector<1x96xf32>
    %5 = vector.broadcast %4 : vector<1x96xf32> to vector<8x96xf32>
    %6 = arith.addf %3, %5 : vector<8x96xf32>
    %c0_6 = arith.constant 0 : index
    %c0_7 = arith.constant 0 : index
    %7 = vector.load %arg7[%c0_6, %c0_7] : memref<8x96xf32, #tpu.memory_space<vmem>>, vector<8x96xf32>
    tpu.vector_store %arg7[%c0_6, %c0_7], %6 {strides = array<i32>} : memref<8x96xf32, #tpu.memory_space<vmem>>, vector<8x96xf32>,
    %c0_8 = arith.constant 0 : index
    %c0_9 = arith.constant 0 : index
    %8 = vector.load %arg7[%c0_8, %c0_9] : memref<8x96xf32, #tpu.memory_space<vmem>>, vector<8x8xf32>
    %9 = arith.truncf %8 : vector<8x8xf32> to vector<8x8xbf16>
    %c0_10 = arith.constant 0 : index
    %c8 = arith.constant 8 : index
    %10 = vector.load %arg7[%c0_10, %c8] : memref<8x96xf32, #tpu.memory_space<vmem>>, vector<8x8xf32>
    %11 = arith.truncf %10 : vector<8x8xf32> to vector<8x8xbf16>
    %c0_11 = arith.constant 0 : index
    %c16 = arith.constant 16 : index
    %12 = vector.load %arg7[%c0_11, %c16] : memref<8x96xf32, #tpu.memory_space<vmem>>, vector<8x8xf32>
    %13 = arith.truncf %12 : vector<8x8xf32> to vector<8x8xbf16>
    %cst_12 = arith.constant dense<0.000000e+00> : vector<8x8xf32>
    %14 = tpu.matmul %9, %11, %cst_12 {dimension_numbers = #tpu.dot_dimension_numbers<[1], [1], [0], [0], [0, 0, 1, 0], [], []>} : vector<8x8xbf16>, vector<8x8xbf16>, vector<8x8xf32> -> vector<8x8xf32>
    %cst_13 = arith.constant dense<0xFF800000> : vector<8xf32>
    %15 = vector.multi_reduction <maximumf>, %14, %cst_13 [1] : vector<8x8xf32> to vector<8xf32>
    %16 = vector.shape_cast %15 : vector<8xf32> to vector<8x1xf32>
    %17 = vector.broadcast %16 : vector<8x1xf32> to vector<8x8xf32>
    %18 = arith.subf %14, %17 : vector<8x8xf32>
    %19 = math.exp %18 : vector<8x8xf32>
    %cst_14 = arith.constant dense<0.000000e+00> : vector<8xf32>
    %20 = vector.multi_reduction <add>, %19, %cst_14 [1] : vector<8x8xf32> to vector<8xf32>
    %21 = vector.shape_cast %20 : vector<8xf32> to vector<8x1xf32>
    %22 = tpu.reciprocal %21 {approx = true} : vector<8x1xf32> -> vector<8x1xf32>
    %23 = vector.broadcast %22 : vector<8x1xf32> to vector<8x8xf32>
    %24 = arith.mulf %19, %23 : vector<8x8xf32>
    %25 = arith.truncf %24 : vector<8x8xf32> to vector<8x8xbf16>
    %cst_15 = arith.constant dense<0.000000e+00> : vector<8x8xf32>
    %26 = tpu.matmul %25, %13, %cst_15 {dimension_numbers = #tpu.dot_dimension_numbers<[1], [0], [0], [1], [0, 0, 1, 1], [], []>} : vector<8x8xbf16>, vector<8x8xbf16>, vector<8x8xf32> -> vector<8x8xf32>
    %c0_16 = arith.constant 0 : index
    %c0_17 = arith.constant 0 : index
    %27 = vector.load %arg8[%c0_16, %c0_17] : memref<8x32xf32, #tpu.memory_space<vmem>>, vector<8x8xf32>
    tpu.vector_store %arg8[%c0_16, %c0_17], %26 {strides = array<i32>} : memref<8x32xf32, #tpu.memory_space<vmem>>, vector<8x8xf32>,
    %c0_18 = arith.constant 0 : index
    %c24 = arith.constant 24 : index
    %28 = vector.load %arg7[%c0_18, %c24] : memref<8x96xf32, #tpu.memory_space<vmem>>, vector<8x8xf32>
    %29 = arith.truncf %28 : vector<8x8xf32> to vector<8x8xbf16>
    %c0_19 = arith.constant 0 : index
    %c32 = arith.constant 32 : index
    %30 = vector.load %arg7[%c0_19, %c32] : memref<8x96xf32, #tpu.memory_space<vmem>>, vector<8x8xf32>
    %31 = arith.truncf %30 : vector<8x8xf32> to vector<8x8xbf16>
    %c0_20 = arith.constant 0 : index
    %c40 = arith.constant 40 : index
    %32 = vector.load %arg7[%c0_20, %c40] : memref<8x96xf32, #tpu.memory_space<vmem>>, vector<8x8xf32>
    %33 = arith.truncf %32 : vector<8x8xf32> to vector<8x8xbf16>
    %cst_21 = arith.constant dense<0.000000e+00> : vector<8x8xf32>
    %34 = tpu.matmul %29, %31, %cst_21 {dimension_numbers = #tpu.dot_dimension_numbers<[1], [1], [0], [0], [0, 0, 1, 0], [], []>} : vector<8x8xbf16>, vector<8x8xbf16>, vector<8x8xf32> -> vector<8x8xf32>
    %cst_22 = arith.constant dense<0xFF800000> : vector<8xf32>
    %35 = vector.multi_reduction <maximumf>, %34, %cst_22 [1] : vector<8x8xf32> to vector<8xf32>
    %36 = vector.shape_cast %35 : vector<8xf32> to vector<8x1xf32>
    %37 = vector.broadcast %36 : vector<8x1xf32> to vector<8x8xf32>
    %38 = arith.subf %34, %37 : vector<8x8xf32>
    %39 = math.exp %38 : vector<8x8xf32>
    %cst_23 = arith.constant dense<0.000000e+00> : vector<8xf32>
    %40 = vector.multi_reduction <add>, %39, %cst_23 [1] : vector<8x8xf32> to vector<8xf32>
    %41 = vector.shape_cast %40 : vector<8xf32> to vector<8x1xf32>
    %42 = tpu.reciprocal %41 {approx = true} : vector<8x1xf32> -> vector<8x1xf32>
    %43 = vector.broadcast %42 : vector<8x1xf32> to vector<8x8xf32>
    %44 = arith.mulf %39, %43 : vector<8x8xf32>
    %45 = arith.truncf %44 : vector<8x8xf32> to vector<8x8xbf16>
    %cst_24 = arith.constant dense<0.000000e+00> : vector<8x8xf32>
    %46 = tpu.matmul %45, %33, %cst_24 {dimension_numbers = #tpu.dot_dimension_numbers<[1], [0], [0], [1], [0, 0, 1, 1], [], []>} : vector<8x8xbf16>, vector<8x8xbf16>, vector<8x8xf32> -> vector<8x8xf32>
    %c0_25 = arith.constant 0 : index
    %c8_26 = arith.constant 8 : index
    %47 = vector.load %arg8[%c0_25, %c8_26] : memref<8x32xf32, #tpu.memory_space<vmem>>, vector<8x8xf32>
    tpu.vector_store %arg8[%c0_25, %c8_26], %46 {strides = array<i32>} : memref<8x32xf32, #tpu.memory_space<vmem>>, vector<8x8xf32>,
    %c0_27 = arith.constant 0 : index
    %c48 = arith.constant 48 : index
    %48 = vector.load %arg7[%c0_27, %c48] : memref<8x96xf32, #tpu.memory_space<vmem>>, vector<8x8xf32>
    %49 = arith.truncf %48 : vector<8x8xf32> to vector<8x8xbf16>
    %c0_28 = arith.constant 0 : index
    %c56 = arith.constant 56 : index
    %50 = vector.load %arg7[%c0_28, %c56] : memref<8x96xf32, #tpu.memory_space<vmem>>, vector<8x8xf32>
    %51 = arith.truncf %50 : vector<8x8xf32> to vector<8x8xbf16>
    %c0_29 = arith.constant 0 : index
    %c64 = arith.constant 64 : index
    %52 = vector.load %arg7[%c0_29, %c64] : memref<8x96xf32, #tpu.memory_space<vmem>>, vector<8x8xf32>
    %53 = arith.truncf %52 : vector<8x8xf32> to vector<8x8xbf16>
    %cst_30 = arith.constant dense<0.000000e+00> : vector<8x8xf32>
    %54 = tpu.matmul %49, %51, %cst_30 {dimension_numbers = #tpu.dot_dimension_numbers<[1], [1], [0], [0], [0, 0, 1, 0], [], []>} : vector<8x8xbf16>, vector<8x8xbf16>, vector<8x8xf32> -> vector<8x8xf32>
    %cst_31 = arith.constant dense<0xFF800000> : vector<8xf32>
    %55 = vector.multi_reduction <maximumf>, %54, %cst_31 [1] : vector<8x8xf32> to vector<8xf32>
    %56 = vector.shape_cast %55 : vector<8xf32> to vector<8x1xf32>
    %57 = vector.broadcast %56 : vector<8x1xf32> to vector<8x8xf32>
    %58 = arith.subf %54, %57 : vector<8x8xf32>
    %59 = math.exp %58 : vector<8x8xf32>
    %cst_32 = arith.constant dense<0.000000e+00> : vector<8xf32>
    %60 = vector.multi_reduction <add>, %59, %cst_32 [1] : vector<8x8xf32> to vector<8xf32>
    %61 = vector.shape_cast %60 : vector<8xf32> to vector<8x1xf32>
    %62 = tpu.reciprocal %61 {approx = true} : vector<8x1xf32> -> vector<8x1xf32>
    %63 = vector.broadcast %62 : vector<8x1xf32> to vector<8x8xf32>
    %64 = arith.mulf %59, %63 : vector<8x8xf32>
    %65 = arith.truncf %64 : vector<8x8xf32> to vector<8x8xbf16>
    %cst_33 = arith.constant dense<0.000000e+00> : vector<8x8xf32>
    %66 = tpu.matmul %65, %53, %cst_33 {dimension_numbers = #tpu.dot_dimension_numbers<[1], [0], [0], [1], [0, 0, 1, 1], [], []>} : vector<8x8xbf16>, vector<8x8xbf16>, vector<8x8xf32> -> vector<8x8xf32>
    %c0_34 = arith.constant 0 : index
    %c16_35 = arith.constant 16 : index
    %67 = vector.load %arg8[%c0_34, %c16_35] : memref<8x32xf32, #tpu.memory_space<vmem>>, vector<8x8xf32>
    tpu.vector_store %arg8[%c0_34, %c16_35], %66 {strides = array<i32>} : memref<8x32xf32, #tpu.memory_space<vmem>>, vector<8x8xf32>,
    %c0_36 = arith.constant 0 : index
    %c72 = arith.constant 72 : index
    %68 = vector.load %arg7[%c0_36, %c72] : memref<8x96xf32, #tpu.memory_space<vmem>>, vector<8x8xf32>
    %69 = arith.truncf %68 : vector<8x8xf32> to vector<8x8xbf16>
    %c0_37 = arith.constant 0 : index
    %c80 = arith.constant 80 : index
    %70 = vector.load %arg7[%c0_37, %c80] : memref<8x96xf32, #tpu.memory_space<vmem>>, vector<8x8xf32>
    %71 = arith.truncf %70 : vector<8x8xf32> to vector<8x8xbf16>
    %c0_38 = arith.constant 0 : index
    %c88 = arith.constant 88 : index
    %72 = vector.load %arg7[%c0_38, %c88] : memref<8x96xf32, #tpu.memory_space<vmem>>, vector<8x8xf32>
    %73 = arith.truncf %72 : vector<8x8xf32> to vector<8x8xbf16>
    %cst_39 = arith.constant dense<0.000000e+00> : vector<8x8xf32>
    %74 = tpu.matmul %69, %71, %cst_39 {dimension_numbers = #tpu.dot_dimension_numbers<[1], [1], [0], [0], [0, 0, 1, 0], [], []>} : vector<8x8xbf16>, vector<8x8xbf16>, vector<8x8xf32> -> vector<8x8xf32>
    %cst_40 = arith.constant dense<0xFF800000> : vector<8xf32>
    %75 = vector.multi_reduction <maximumf>, %74, %cst_40 [1] : vector<8x8xf32> to vector<8xf32>
    %76 = vector.shape_cast %75 : vector<8xf32> to vector<8x1xf32>
    %77 = vector.broadcast %76 : vector<8x1xf32> to vector<8x8xf32>
    %78 = arith.subf %74, %77 : vector<8x8xf32>
    %79 = math.exp %78 : vector<8x8xf32>
    %cst_41 = arith.constant dense<0.000000e+00> : vector<8xf32>
    %80 = vector.multi_reduction <add>, %79, %cst_41 [1] : vector<8x8xf32> to vector<8xf32>
    %81 = vector.shape_cast %80 : vector<8xf32> to vector<8x1xf32>
    %82 = tpu.reciprocal %81 {approx = true} : vector<8x1xf32> -> vector<8x1xf32>
    %83 = vector.broadcast %82 : vector<8x1xf32> to vector<8x8xf32>
    %84 = arith.mulf %79, %83 : vector<8x8xf32>
    %85 = arith.truncf %84 : vector<8x8xf32> to vector<8x8xbf16>
    %cst_42 = arith.constant dense<0.000000e+00> : vector<8x8xf32>
    %86 = tpu.matmul %85, %73, %cst_42 {dimension_numbers = #tpu.dot_dimension_numbers<[1], [0], [0], [1], [0, 0, 1, 1], [], []>} : vector<8x8xbf16>, vector<8x8xbf16>, vector<8x8xf32> -> vector<8x8xf32>
    %c0_43 = arith.constant 0 : index
    %c24_44 = arith.constant 24 : index
    %87 = vector.load %arg8[%c0_43, %c24_44] : memref<8x32xf32, #tpu.memory_space<vmem>>, vector<8x8xf32>
    tpu.vector_store %arg8[%c0_43, %c24_44], %86 {strides = array<i32>} : memref<8x32xf32, #tpu.memory_space<vmem>>, vector<8x8xf32>,
    %c0_45 = arith.constant 0 : index
    %c0_46 = arith.constant 0 : index
    %88 = vector.load %arg8[%c0_45, %c0_46] : memref<8x32xf32, #tpu.memory_space<vmem>>, vector<8x32xf32>
    %89 = arith.truncf %88 : vector<8x32xf32> to vector<8x32xbf16>
    %c0_47 = arith.constant 0 : index
    %c0_48 = arith.constant 0 : index
    %90 = vector.load %arg4[%c0_47, %c0_48] : memref<32x32xbf16, #tpu.memory_space<vmem>>, vector<32x32xbf16>
    %cst_49 = arith.constant dense<0.000000e+00> : vector<8x32xf32>
    %91 = tpu.matmul %89, %90, %cst_49 {dimension_numbers = #tpu.dot_dimension_numbers<[1], [0], [0], [1], [0, 0, 1, 1], [], []>} : vector<8x32xbf16>, vector<32x32xbf16>, vector<8x32xf32> -> vector<8x32xf32>
    %c0_50 = arith.constant 0 : index
    %c0_51 = arith.constant 0 : index
    %92 = vector.load %arg5[%c0_50, %c0_51] : memref<1x32xf32, #tpu.memory_space<vmem>>, vector<1x32xf32>
    %93 = vector.broadcast %92 : vector<1x32xf32> to vector<8x32xf32>
    %94 = arith.addf %91, %93 : vector<8x32xf32>
    %c0_52 = arith.constant 0 : index
    %c0_53 = arith.constant 0 : index
    %c0_54 = arith.constant 0 : index
    %95 = vector.load %arg6[%c0_52, %c0_53, %c0_54] : memref<1x8x32xf32, #tpu.memory_space<vmem>>, vector<1x8x32xf32>
    %96 = vector.shape_cast %95 : vector<1x8x32xf32> to vector<8x32xf32>
    %97 = vector.shape_cast %94 : vector<8x32xf32> to vector<1x8x32xf32>
    tpu.vector_store %arg6[%c0_52, %c0_53, %c0_54], %97 {strides = array<i32>} : memref<1x8x32xf32, #tpu.memory_space<vmem>>, vector<1x8x32xf32>,
    return
  }
  func.func @transform_0(%arg0: i32) -> (i32, i32, i32) {
    %c0_i32 = arith.constant 0 : i32
    %c0_i32_0 = arith.constant 0 : i32
    %c0_i32_1 = arith.constant 0 : i32
    return %arg0, %c0_i32, %c0_i32_0 : i32, i32, i32
  }
  func.func @transform_1(%arg0: i32) -> (i32, i32) {
    %c0_i32 = arith.constant 0 : i32
    %c0_i32_0 = arith.constant 0 : i32
    %c0_i32_1 = arith.constant 0 : i32
    return %c0_i32, %c0_i32_0 : i32, i32
  }
  func.func @transform_2(%arg0: i32) -> (i32, i32) {
    %c0_i32 = arith.constant 0 : i32
    %c0_i32_0 = arith.constant 0 : i32
    %c0_i32_1 = arith.constant 0 : i32
    return %c0_i32, %c0_i32_0 : i32, i32
  }
  func.func @transform_3(%arg0: i32) -> (i32, i32) {
    %c0_i32 = arith.constant 0 : i32
    %c0_i32_0 = arith.constant 0 : i32
    %c0_i32_1 = arith.constant 0 : i32
    return %c0_i32, %c0_i32_0 : i32, i32
  }
  func.func @transform_4(%arg0: i32) -> (i32, i32) {
    %c0_i32 = arith.constant 0 : i32
    %c0_i32_0 = arith.constant 0 : i32
    %c0_i32_1 = arith.constant 0 : i32
    return %c0_i32, %c0_i32_0 : i32, i32
  }
  func.func @transform_5(%arg0: i32) -> (i32, i32, i32) {
    %c0_i32 = arith.constant 0 : i32
    %c0_i32_0 = arith.constant 0 : i32
    %c0_i32_1 = arith.constant 0 : i32
    return %arg0, %c0_i32, %c0_i32_0 : i32, i32, i32
  }
}

</mosaic_0001>

<llo_original>
// kernel: tpu_custom_call.1
$region0: #{tpu_custom_call.1}
  #allocation0 [shape = 'u32[]', space=smem, size = 0x4, offset = 0x4, fixed_abs, tag = 'smem constant byte address 0x4 - core index']
  #allocation1 [shape = 'u32[144,128]{1,0:T(1,128)}', space=vmem, size = 0x12000, scoped, tag = 'internal scratch']
  #allocation2 [shape = 'f32[8,96]{1,0:T(8,128)}', space=vmem, size = 0x1000, scoped, tag = 'scratch operand']
  #allocation3 [shape = 'f32[8,32]{1,0:T(8,128)}', space=vmem, size = 0x1000, scoped, tag = 'scratch operand']
  %s0 = inlined_call_operand.hbm [shape: bf16[2,8,32], index: 0, kind: input, shape index: {}]
  %s1 = inlined_call_operand.hbm [shape: bf16[32,96], index: 1, kind: input, shape index: {}]
  %s2 = inlined_call_operand.vmem [shape: f32[1,96], index: 2, kind: input, shape index: {}]
  %s3 = inlined_call_operand.hbm [shape: bf16[32,32], index: 3, kind: input, shape index: {}]
  %s4 = inlined_call_operand.vmem [shape: f32[1,32], index: 4, kind: input, shape index: {}]
  %s5 = inlined_call_operand.hbm [shape: f32[2,8,32], index: 5, kind: output, shape index: {}]
  %s6 = sld [smem:[#allocation0]]
  $region65: #{tpu_custom_call.1} parent=0
    _
  %s8 = ssub.s32 1, %s6
  %s9 = scalar_select 0, %s8, %s6
  $region1: #{tpu_custom_call.1} parent=0
    #allocation4 [shape = 'u8[4096]{0}', space=vmem, size = 0x1000, scoped, tag = 'input window, operand 0']
    #allocation5 [shape = 's32[2]{0}', space=sflag, size = 0x8, scoped, tag = 'scoped memory for tpu_custom_call.1']
    #allocation6 [shape = 's32[2]{0}', space=sflag, size = 0x8, scoped, tag = 'scoped memory for tpu_custom_call.1']
    #allocation7 [shape = 'u8[8192]{0}', space=vmem, size = 0x2000, scoped, tag = 'input window, operand 1, single buffered']
    #allocation8 [shape = 's32[1]{0}', space=sflag, size = 0x4, scoped, tag = 'scoped memory for tpu_custom_call.1']
    #allocation9 [shape = 'u8[8192]{0}', space=vmem, size = 0x2000, scoped, tag = 'input window, operand 3, single buffered']
    #allocation10 [shape = 'u8[8192]{0}', space=vmem, size = 0x2000, scoped, tag = 'output window, operand 0']
    %10 = vsyncpa [#allocation5], 0
    %s11 = scalar_lea.sflag [#allocation5], 1
    %12 = vsyncpa %s11, 0
    %13 = vsyncpa [#allocation8], 0
    %14 = vsyncpa [#allocation6], 0
    %s15 = scalar_lea.sflag [#allocation6], 1
    %16 = vsyncpa %s15, 0
    loop: start=0, step=1, limit=4
    $region2: #{tpu_custom_call.1} parent=1 // loop_pre_header
      _
    $region3: #{tpu_custom_call.1} parent=1 // loop_header
      %s18 = sphi 0, %s22
      %p19 = scmp.ge.s32.totalorder %s18, 4
      %s28 = sphi 0, %s30
      %s31 = sphi 0, %s28
      %s32 = sphi 0, %s31
      %s48 = sphi 0, %s32
      %s52 = sphi 0, %s52
      %s54 = sphi 0, %s52
      %s55 = sphi 0, %s54
      %s69 = sphi 0, %s55
      %s73 = sphi 0, %s73
      %s75 = sphi 0, %s73
      %s76 = sphi 0, %s75
      %s90 = sphi 0, %s76
      %s94 = sphi 0, %s94
      %s96 = sphi 0, %s94
      %s97 = sphi 0, %s96
      %s111 = sphi 0, %s97
      %s115 = sphi 0, %s115
      %s117 = sphi 0, %s115
      %s118 = sphi 0, %s117
      %s132 = sphi 0, %s118
      %s138 = sphi 0, %s140
      %s141 = sphi 0, %s138
      %s142 = sphi 0, %s141
      %s158 = sphi 0, %s142
    $region4: #{tpu_custom_call.1} parent=1 // loop_header_branch
      %21 = sbr.rel (%p19) target = $region8
    $region5: #{tpu_custom_call.1} parent=1 // loop_body
      %s23 = ssub.s32 %s18, 1
      %s24 = ssub.s32 %s18, 2
      %s25 = sadd.s32 %s18, 1
      %s26 = ssub.s32 %s18, %s25
      %p27 = scmp.eq.s32.totalorder %s26, 0
      %s29 = sadd.s32 %s28, 1
      %s30 = scalar_select %p27, %s28, %s29
      %p33 = pneg %p27
      %p34 = scmp.eq.s32.totalorder %s18, 1
      %p35 = por %p33, %p34
      %p36 = scmp.ne.s32.totalorder %s28, %s31
      %p37 = scmp.eq.s32.totalorder %s18, 0
      %p38 = por %p36, %p37
      %p39 = scmp.ne.s32.totalorder %s28, %s31
      %p40 = scmp.eq.s32.totalorder %s23, 1
      %p41 = por %p39, %p40
      %p42 = scmp.ne.s32.totalorder %s31, %s32
      %p43 = scmp.eq.s32.totalorder %s23, 0
      %p44 = por %p42, %p43
      %p45 = scmp.ne.s32.totalorder %s31, %s32
      %p46 = scmp.eq.s32.totalorder %s24, 1
      %p47 = por %p45, %p46
      %p49 = scmp.ne.s32.totalorder %s32, %s48
      %p50 = scmp.eq.s32.totalorder %s24, 0
      %p51 = por %p49, %p50
      %s53 = sadd.s32 %s52, 1
      %p56 = scmp.eq.s32.totalorder %s18, 1
      %p57 = scmp.ne.s32.totalorder %s52, %s54
      %p58 = scmp.eq.s32.totalorder %s18, 0
      %p59 = por %p57, %p58
      %p60 = scmp.ne.s32.totalorder %s52, %s54
      %p61 = scmp.eq.s32.totalorder %s23, 1
      %p62 = por %p60, %p61
      %p63 = scmp.ne.s32.totalorder %s54, %s55
      %p64 = scmp.eq.s32.totalorder %s23, 0
      %p65 = por %p63, %p64
      %p66 = scmp.ne.s32.totalorder %s54, %s55
      %p67 = scmp.eq.s32.totalorder %s24, 1
      %p68 = por %p66, %p67
      %p70 = scmp.ne.s32.totalorder %s55, %s69
      %p71 = scmp.eq.s32.totalorder %s24, 0
      %p72 = por %p70, %p71
      %s74 = sadd.s32 %s73, 1
      %p77 = scmp.eq.s32.totalorder %s18, 1
      %p78 = scmp.ne.s32.totalorder %s73, %s75
      %p79 = scmp.eq.s32.totalorder %s18, 0
      %p80 = por %p78, %p79
      %p81 = scmp.ne.s32.totalorder %s73, %s75
      %p82 = scmp.eq.s32.totalorder %s23, 1
      %p83 = por %p81, %p82
      %p84 = scmp.ne.s32.totalorder %s75, %s76
      %p85 = scmp.eq.s32.totalorder %s23, 0
      %p86 = por %p84, %p85
      %p87 = scmp.ne.s32.totalorder %s75, %s76
      %p88 = scmp.eq.s32.totalorder %s24, 1
      %p89 = por %p87, %p88
      %p91 = scmp.ne.s32.totalorder %s76, %s90
      %p92 = scmp.eq.s32.totalorder %s24, 0
      %p93 = por %p91, %p92
      %s95 = sadd.s32 %s94, 1
      %p98 = scmp.eq.s32.totalorder %s18, 1
      %p99 = scmp.ne.s32.totalorder %s94, %s96
      %p100 = scmp.eq.s32.totalorder %s18, 0
      %p101 = por %p99, %p100
      %p102 = scmp.ne.s32.totalorder %s94, %s96
      %p103 = scmp.eq.s32.totalorder %s23, 1
      %p104 = por %p102, %p103
      %p105 = scmp.ne.s32.totalorder %s96, %s97
      %p106 = scmp.eq.s32.totalorder %s23, 0
      %p107 = por %p105, %p106
      %p108 = scmp.ne.s32.totalorder %s96, %s97
      %p109 = scmp.eq.s32.totalorder %s24, 1
      %p110 = por %p108, %p109
      %p112 = scmp.ne.s32.totalorder %s97, %s111
      %p113 = scmp.eq.s32.totalorder %s24, 0
      %p114 = por %p112, %p113
      %s116 = sadd.s32 %s115, 1
      %p119 = scmp.eq.s32.totalorder %s18, 1
      %p120 = scmp.ne.s32.totalorder %s115, %s117
      %p121 = scmp.eq.s32.totalorder %s18, 0
      %p122 = por %p120, %p121
      %p123 = scmp.ne.s32.totalorder %s115, %s117
      %p124 = scmp.eq.s32.totalorder %s23, 1
      %p125 = por %p123, %p124
      %p126 = scmp.ne.s32.totalorder %s117, %s118
      %p127 = scmp.eq.s32.totalorder %s23, 0
      %p128 = por %p126, %p127
      %p129 = scmp.ne.s32.totalorder %s117, %s118
      %p130 = scmp.eq.s32.totalorder %s24, 1
      %p131 = por %p129, %p130
      %p133 = scmp.ne.s32.totalorder %s118, %s132
      %p134 = scmp.eq.s32.totalorder %s24, 0
      %p135 = por %p133, %p134
      %s136 = ssub.s32 %s18, %s25
      %p137 = scmp.eq.s32.totalorder %s136, 0
      %s139 = sadd.s32 %s138, 1
      %s140 = scalar_select %p137, %s138, %s139
      %p143 = pneg %p137
      %p144 = scmp.eq.s32.totalorder %s18, 1
      %p145 = por %p143, %p144
      %p146 = scmp.ne.s32.totalorder %s138, %s141
      %p147 = scmp.eq.s32.totalorder %s18, 0
      %p148 = por %p146, %p147
      %p149 = scmp.ne.s32.totalorder %s138, %s141
      %p150 = scmp.eq.s32.totalorder %s23, 1
      %p151 = por %p149, %p150
      %p152 = scmp.ne.s32.totalorder %s141, %s142
      %p153 = scmp.eq.s32.totalorder %s23, 0
      %p154 = por %p152, %p153
      %p155 = scmp.ne.s32.totalorder %s141, %s142
      %p156 = scmp.eq.s32.totalorder %s24, 1
      %p157 = por %p155, %p156
      %p159 = scmp.ne.s32.totalorder %s142, %s158
      %p160 = scmp.eq.s32.totalorder %s24, 0
      %p161 = por %p159, %p160
      %p162 = scmp.le.s32.totalorder 1, %s18
      %p163 = scmp.lt.s32.totalorder %s18, 3
      %p164 = pnand %p162, %p163
      %p165 = pneg %p164
      // Predicated region
      $region9: #{tpu_custom_call.1} parent=5 // pred_check
        _
      $region10: #{tpu_custom_call.1} parent=5 // pred_check_branch
        %167 = sbr.rel (%p164) target = $region12
      $region11: #{tpu_custom_call.1} parent=5 // pred_region
        %s168 = ssub.s32 %s18, 1
        // Predicated region
        $region13: #{tpu_custom_call.1} parent=11 // pred_check
          %p169 = pneg %p65
        $region14: #{tpu_custom_call.1} parent=11 // pred_check_branch
          %171 = sbr.rel (%p169) target = $region16
        $region15: #{tpu_custom_call.1} parent=11 // pred_region
          %s173 = ssub.s32 256, 256
          %174 = vsyncadd [#allocation8], %s173
          %s175 = sshll.u32 [#allocation7], 4
          %s176 = int_to_ptr.vmem [resolvable:$true] %s175
          %181 = dma.hbm_to_vmem [thread:$0]  %s1, 256, %s176, [#allocation8], 64, 64, 4
        $region16: #{tpu_custom_call.1} parent=11 // pred_fallthru
          _
        // Predicated region
        $region17: #{tpu_custom_call.1} parent=11 // pred_check
          %p182 = pneg %p86
        $region18: #{tpu_custom_call.1} parent=11 // pred_check_branch
          %184 = sbr.rel (%p182) target = $region20
        $region19: #{tpu_custom_call.1} parent=11 // pred_region
          _
        $region20: #{tpu_custom_call.1} parent=11 // pred_fallthru
          _
        // Predicated region
        $region21: #{tpu_custom_call.1} parent=11 // pred_check
          %p185 = pneg %p107
        $region22: #{tpu_custom_call.1} parent=11 // pred_check_branch
          %187 = sbr.rel (%p185) target = $region24
        $region23: #{tpu_custom_call.1} parent=11 // pred_region
          %s189 = ssub.s32 256, 256
          %190 = vsyncadd [#allocation8], %s189
          %s191 = sshll.u32 [#allocation9], 4
          %s192 = int_to_ptr.vmem [resolvable:$true] %s191
          %197 = dma.hbm_to_vmem [thread:$0]  %s3, 256, %s192, [#allocation8], 64, 64, 4
        $region24: #{tpu_custom_call.1} parent=11 // pred_fallthru
          _
        // Predicated region
        $region25: #{tpu_custom_call.1} parent=11 // pred_check
          %p198 = pneg %p128
        $region26: #{tpu_custom_call.1} parent=11 // pred_check_branch
          %200 = sbr.rel (%p198) target = $region28
        $region27: #{tpu_custom_call.1} parent=11 // pred_region
          _
        $region28: #{tpu_custom_call.1} parent=11 // pred_fallthru
          _
      $region12: #{tpu_custom_call.1} parent=5 // pred_fallthru
        _
      %p201 = scmp.lt.s32.totalorder %s18, 2
      // Predicated region
      $region29: #{tpu_custom_call.1} parent=5 // pred_check
        %p202 = pneg %p201
      $region30: #{tpu_custom_call.1} parent=5 // pred_check_branch
        %204 = sbr.rel (%p202) target = $region32
      $region31: #{tpu_custom_call.1} parent=5 // pred_region
        // Predicated region
        $region33: #{tpu_custom_call.1} parent=31 // pred_check
          %p205 = pneg %p38
        $region34: #{tpu_custom_call.1} parent=31 // pred_check_branch
          %207 = sbr.rel (%p205) target = $region36
        $region35: #{tpu_custom_call.1} parent=31 // pred_region
          %s208 = sand.u32 %s28, 1
          %s209 = scalar_lea.sflag [#allocation5], %s208
          %s210 = sand.u32 %s28, 1
          %s211 = smul.addr %s210, 4
          %s212 = scalar_lea.vmem [#allocation4], %s211
          %s214 = ssub.s32 64, 64
          %215 = vsyncadd %s209, %s214
          %s216 = smul.addr %s18, 64
          %s217 = scalar_lea.hbm %s0, %s216
          %s219 = sshll.u32 %s212, 4
          %s220 = int_to_ptr.vmem [resolvable:$true] %s219
          %222 = dma.hbm_to_vmem [thread:$0]  %s217, 64, %s220, %s209
        $region36: #{tpu_custom_call.1} parent=31 // pred_fallthru
          _
      $region32: #{tpu_custom_call.1} parent=5 // pred_fallthru
        _
      %p223 = scmp.le.s32.totalorder 1, %s18
      %p224 = scmp.lt.s32.totalorder %s18, 3
      %p225 = pnand %p223, %p224
      %p226 = pneg %p225
      // Predicated region
      $region37: #{tpu_custom_call.1} parent=5 // pred_check
        _
      $region38: #{tpu_custom_call.1} parent=5 // pred_check_branch
        %228 = sbr.rel (%p225) target = $region40
      $region39: #{tpu_custom_call.1} parent=5 // pred_region
        %s229 = ssub.s32 %s18, 1
        %s230 = sand.u32 %s31, 1
        %s231 = scalar_lea.sflag [#allocation5], %s230
        %s232 = sand.u32 %s31, 1
        %s233 = smul.addr %s232, 4
        %s234 = scalar_lea.vmem [#allocation4], %s233
        // Predicated region
        $region41: #{tpu_custom_call.1} parent=39 // pred_check
          %p235 = pneg %p44
        $region42: #{tpu_custom_call.1} parent=39 // pred_check_branch
          %237 = sbr.rel (%p235) target = $region44
        $region43: #{tpu_custom_call.1} parent=39 // pred_region
          %238 = dma.done %s231, 64
        $region44: #{tpu_custom_call.1} parent=39 // pred_fallthru
          _
        // Predicated region
        $region45: #{tpu_custom_call.1} parent=39 // pred_check
          %p239 = pneg %p65
        $region46: #{tpu_custom_call.1} parent=39 // pred_check_branch
          %241 = sbr.rel (%p239) target = $region48
        $region47: #{tpu_custom_call.1} parent=39 // pred_region
          %242 = dma.done [#allocation8], 256
        $region48: #{tpu_custom_call.1} parent=39 // pred_fallthru
          _
        // Predicated region
        $region49: #{tpu_custom_call.1} parent=39 // pred_check
          %p243 = pneg %p107
        $region50: #{tpu_custom_call.1} parent=39 // pred_check_branch
          %245 = sbr.rel (%p243) target = $region52
        $region51: #{tpu_custom_call.1} parent=39 // pred_region
          %246 = dma.done [#allocation8], 256
        $region52: #{tpu_custom_call.1} parent=39 // pred_fallthru
          _
        %s247 = sand.u32 %s31, 1
        %s248 = scalar_lea.sflag [#allocation5], %s247
        %s249 = sand.u32 %s31, 1
        %s250 = smul.addr %s249, 4
        %s251 = scalar_lea.vmem [#allocation4], %s250
        %p252 = pneg %p44
        %p253 = pneg %p41
        %p254 = pneg %p65
        %p255 = pneg %p62
        %p256 = pneg %p86
        %p257 = pneg %p83
        %p258 = pneg %p107
        %p259 = pneg %p104
        %p260 = pneg %p128
        %p261 = pneg %p125
        %p262 = pneg %p154
        %p263 = pneg %p151
        %s264 = sand.u32 %s141, 1
        %s265 = scalar_lea.sflag [#allocation6], %s264
        %s266 = sand.u32 %s141, 1
        %s267 = smul.addr %s266, 8
        %s268 = scalar_lea.vmem [#allocation10], %s267
        %v270 = vld [vmem:[%s234] sm:$0xf]
        %v271 = vld [vmem:[#allocation7] sm:$0xf]
        %v272 = vld [vmem:[#allocation7 + $0x4] sm:$0xf]
        %v273 = vld [vmem:[#allocation7 + $0x8] sm:$0xf]
        %v274 = vld [vmem:[#allocation7 + $0xc] sm:$0xf]
        %v275 = vld [vmem:[%s2] sm:$0x1]
        %v277 = vlaneseq
        %v278 = vshrl.u32 %v277, 7
        %v279 = vsub.s32 0, %v278
        %v280 = vrot.slane %v275, %v279
        %v286 = vunpack.c.l.b16 %v271
        %v287 = vunpack.c.l.b16 %v272
        %v288 = vunpack.c.l.b16 %v273
        %v289 = vunpack.c.l.b16 %v274
        %v290 = vpack.c.b16 %v287, %v286
        %v291 = vpack.c.b16 %v289, %v288
        %vm294 = vcmask 261120
        %v296 = vsel %vm294, %v270, 0
        %298 = vmatprep.subr.bf16.mxu0 0
        %299 = vmatpush1.bf16.msra.mxu0 %v290
        %300 = vmatprep.subr.bf16.mxu0 0
        %301 = vmatpush1.bf16.msra.mxu0 %v291
        %302 = vmatprep.subr.bf16.mxu0 0
        %303 = vmatpush1.bf16.msra.mxu0 0
        %304 = vmatprep.subr.bf16.mxu0 0
        %305 = vmatpush1.bf16.msra.mxu0 0
        %306 = vmatprep.subr.bf16.mxu0 0
        %307 = vmatpush1.bf16.msra.mxu0 0
        %308 = vmatprep.subr.bf16.mxu0 0
        %309 = vmatpush1.bf16.msra.mxu0 0
        %310 = vmatprep.subr.bf16.mxu0 0
        %311 = vmatpush1.bf16.msra.mxu0 0
        %312 = vmatprep.subr.bf16.mxu0 0
        %313 = vmatpush1.bf16.msra.mxu0 0
        %314 = vmatprep.subr.bf16.mxu0 0
        %315 = vmatpush1.bf16.msra.mxu0 0
        %316 = vmatprep.subr.bf16.mxu0 0
        %317 = vmatpush1.bf16.msra.mxu0 0
        %318 = vmatprep.subr.bf16.mxu0 0
        %319 = vmatpush1.bf16.msra.mxu0 0
        %320 = vmatprep.subr.bf16.mxu0 0
        %321 = vmatpush1.bf16.msra.mxu0 0
        %322 = vmatprep.subr.bf16.mxu0 0
        %323 = vmatpush1.bf16.msra.mxu0 0
        %324 = vmatprep.subr.bf16.mxu0 0
        %325 = vmatpush1.bf16.msra.mxu0 0
        %326 = vmatprep.subr.bf16.mxu0 0
        %327 = vmatpush1.bf16.msra.mxu0 0
        %328 = vmatprep.subr.bf16.mxu0 0
        %329 = vmatpush1.bf16.msra.mxu0 0
        %330 = vmatprep.mubr.bf16.mxu0 0
        %331 = vmatmul.mubr.bf16.gmra.mrb[0].mxu0 %v296
        %v332 = vpop.f32.mrb[0].mxu0
        %v333 = vadd.f32 %v280, %v332
        %v334 = vpop.f32.mrb[0].mxu0
        %v335 = vpop.f32.mrb[0].mxu0
        %v336 = vpop.f32.mrb[0].mxu0
        %337 = vdwg.mxu0
        %vm338 = vcmask 785408
        %339 = vst.msk [vmem:[#allocation2] sm:$0xff] %vm338, %v333
        %v340 = vld [vmem:[#allocation2] sm:$0xff]
        %v341 = vpack.c.bf16 %v340, %v340
        %343 = vrot.lane.b32.xlu0 %v341, 120
        %v344 = vpop.permute.xlu0 %343
        %vm345 = vcmask 64512
        %v347 = vsel %vm345, %v341, 0
        %v350 = vsel %vm345, %v344, 0
        %352 = vmatprep.subr.bf16.mxu0 0
        %353 = vmatpush1.bf16.xpose.msra.mxu0 %v350
        %354 = vmatprep.subr.bf16.mxu0 0
        %355 = vmatpush1.bf16.xpose.msra.mxu0 0
        %356 = vmatprep.subr.bf16.mxu0 0
        %357 = vmatpush1.bf16.xpose.msra.mxu0 0
        %358 = vmatprep.subr.bf16.mxu0 0
        %359 = vmatpush1.bf16.xpose.msra.mxu0 0
        %360 = vmatprep.subr.bf16.mxu0 0
        %361 = vmatpush1.bf16.xpose.msra.mxu0 0
        %362 = vmatprep.subr.bf16.mxu0 0
        %363 = vmatpush1.bf16.xpose.msra.mxu0 0
        %364 = vmatprep.subr.bf16.mxu0 0
        %365 = vmatpush1.bf16.xpose.msra.mxu0 0
        %366 = vmatprep.subr.bf16.mxu0 0
        %367 = vmatpush1.bf16.xpose.msra.mxu0 0
        %368 = vmatprep.subr.bf16.mxu0 0
        %369 = vmatpush1.bf16.xpose.msra.mxu0 0
        %370 = vmatprep.subr.bf16.mxu0 0
        %371 = vmatpush1.bf16.xpose.msra.mxu0 0
        %372 = vmatprep.subr.bf16.mxu0 0
        %373 = vmatpush1.bf16.xpose.msra.mxu0 0
        %374 = vmatprep.subr.bf16.mxu0 0
        %375 = vmatpush1.bf16.xpose.msra.mxu0 0
        %376 = vmatprep.subr.bf16.mxu0 0
        %377 = vmatpush1.bf16.xpose.msra.mxu0 0
        %378 = vmatprep.subr.bf16.mxu0 0
        %379 = vmatpush1.bf16.xpose.msra.mxu0 0
        %380 = vmatprep.subr.bf16.mxu0 0
        %381 = vmatpush1.bf16.xpose.msra.mxu0 0
        %382 = vmatprep.subr.bf16.mxu0 0
        %383 = vmatpush1.bf16.xpose.msra.mxu0 0
        %384 = vmatprep.mubr.bf16.mxu0 0
        %385 = vmatmul.mubr.bf16.gmra.mrb[0].mxu0 %v347
        %v386 = vpop.f32.mrb[0].mxu0
        %v387 = vadd.f32 0.0, %v386
        %v388 = vpop.f32.mrb[0].mxu0
        %v389 = vpop.f32.mrb[0].mxu0
        %v390 = vpop.f32.mrb[0].mxu0
        %391 = vdwg.mxu0
        %v392 = vsel %vm345, %v387, -inf
        %393 = vmax.xlane.f32.xlu0 %v392
        %v394 = vpop.xlane.xlu0 %393
        %v395 = vsub.f32 %v387, %v394
        %v396 = vmul.f32 %v395, 1.442695
        %v397 = vpow.pop %v396
        %v398 = vsel %vm345, %v397, 0.0
        %399 = vadd.xlane.f32.xlu0 %v398
        %v400 = vpop.xlane.xlu0 %399
        %v401 = vrcp.pop %v400
        %v402 = vmul.f32 %v397, %v401
        %v403 = vpack.c.bf16 %v402, %v402
        %404 = vrot.lane.b32.xlu0 %v341, 112
        %v405 = vpop.permute.xlu0 %404
        %v407 = vsel %vm345, %v403, 0
        %vm409 = vcmask 1043456
        %v411 = vsel %vm409, %v405, 0
        %413 = vmatprep.subr.bf16.mxu0 0
        %414 = vmatpush1.bf16.msra.mxu0 %v411
        %415 = vmatprep.subr.bf16.mxu0 0
        %416 = vmatpush1.bf16.msra.mxu0 0
        %417 = vmatprep.subr.bf16.mxu0 0
        %418 = vmatpush1.bf16.msra.mxu0 0
        %419 = vmatprep.subr.bf16.mxu0 0
        %420 = vmatpush1.bf16.msra.mxu0 0
        %421 = vmatprep.subr.bf16.mxu0 0
        %422 = vmatpush1.bf16.msra.mxu0 0
        %423 = vmatprep.subr.bf16.mxu0 0
        %424 = vmatpush1.bf16.msra.mxu0 0
        %425 = vmatprep.subr.bf16.mxu0 0
        %426 = vmatpush1.bf16.msra.mxu0 0
        %427 = vmatprep.subr.bf16.mxu0 0
        %428 = vmatpush1.bf16.msra.mxu0 0
        %429 = vmatprep.subr.bf16.mxu0 0
        %430 = vmatpush1.bf16.msra.mxu0 0
        %431 = vmatprep.subr.bf16.mxu0 0
        %432 = vmatpush1.bf16.msra.mxu0 0
        %433 = vmatprep.subr.bf16.mxu0 0
        %434 = vmatpush1.bf16.msra.mxu0 0
        %435 = vmatprep.subr.bf16.mxu0 0
        %436 = vmatpush1.bf16.msra.mxu0 0
        %437 = vmatprep.subr.bf16.mxu0 0
        %438 = vmatpush1.bf16.msra.mxu0 0
        %439 = vmatprep.subr.bf16.mxu0 0
        %440 = vmatpush1.bf16.msra.mxu0 0
        %441 = vmatprep.subr.bf16.mxu0 0
        %442 = vmatpush1.bf16.msra.mxu0 0
        %443 = vmatprep.subr.bf16.mxu0 0
        %444 = vmatpush1.bf16.msra.mxu0 0
        %445 = vmatprep.mubr.bf16.mxu0 0
        %446 = vmatmul.mubr.bf16.gmra.mrb[0].mxu0 %v407
        %v447 = vpop.f32.mrb[0].mxu0
        %v448 = vadd.f32 0.0, %v447
        %v449 = vpop.f32.mrb[0].mxu0
        %v450 = vpop.f32.mrb[0].mxu0
        %v451 = vpop.f32.mrb[0].mxu0
        %452 = vdwg.mxu0
        %453 = vst.msk [vmem:[#allocation3] sm:$0xff] %vm345, %v448
        %v454 = vld [vmem:[#allocation2] sm:$0xff]
        %v455 = vpack.c.bf16 %v454, %v454
        %457 = vrot.lane.b32.xlu0 %v455, 104
        %v458 = vpop.permute.xlu0 %457
        %459 = vrot.lane.b32.xlu0 %v455, 96
        %v460 = vpop.permute.xlu0 %459
        %v462 = vsel %vm345, %v458, 0
        %v465 = vsel %vm345, %v460, 0
        %467 = vmatprep.subr.bf16.mxu0 0
        %468 = vmatpush1.bf16.xpose.msra.mxu0 %v465
        %469 = vmatprep.subr.bf16.mxu0 0
        %470 = vmatpush1.bf16.xpose.msra.mxu0 0
        %471 = vmatprep.subr.bf16.mxu0 0
        %472 = vmatpush1.bf16.xpose.msra.mxu0 0
        %473 = vmatprep.subr.bf16.mxu0 0
        %474 = vmatpush1.bf16.xpose.msra.mxu0 0
        %475 = vmatprep.subr.bf16.mxu0 0
        %476 = vmatpush1.bf16.xpose.msra.mxu0 0
        %477 = vmatprep.subr.bf16.mxu0 0
        %478 = vmatpush1.bf16.xpose.msra.mxu0 0
        %479 = vmatprep.subr.bf16.mxu0 0
        %480 = vmatpush1.bf16.xpose.msra.mxu0 0
        %481 = vmatprep.subr.bf16.mxu0 0
        %482 = vmatpush1.bf16.xpose.msra.mxu0 0
        %483 = vmatprep.subr.bf16.mxu0 0
        %484 = vmatpush1.bf16.xpose.msra.mxu0 0
        %485 = vmatprep.subr.bf16.mxu0 0
        %486 = vmatpush1.bf16.xpose.msra.mxu0 0
        %487 = vmatprep.subr.bf16.mxu0 0
        %488 = vmatpush1.bf16.xpose.msra.mxu0 0
        %489 = vmatprep.subr.bf16.mxu0 0
        %490 = vmatpush1.bf16.xpose.msra.mxu0 0
        %491 = vmatprep.subr.bf16.mxu0 0
        %492 = vmatpush1.bf16.xpose.msra.mxu0 0
        %493 = vmatprep.subr.bf16.mxu0 0
        %494 = vmatpush1.bf16.xpose.msra.mxu0 0
        %495 = vmatprep.subr.bf16.mxu0 0
        %496 = vmatpush1.bf16.xpose.msra.mxu0 0
        %497 = vmatprep.subr.bf16.mxu0 0
        %498 = vmatpush1.bf16.xpose.msra.mxu0 0
        %499 = vmatprep.mubr.bf16.mxu0 0
        %500 = vmatmul.mubr.bf16.gmra.mrb[0].mxu0 %v462
        %v501 = vpop.f32.mrb[0].mxu0
        %v502 = vadd.f32 0.0, %v501
        %v503 = vpop.f32.mrb[0].mxu0
        %v504 = vpop.f32.mrb[0].mxu0
        %v505 = vpop.f32.mrb[0].mxu0
        %506 = vdwg.mxu0
        %v507 = vsel %vm345, %v502, -inf
        %508 = vmax.xlane.f32.xlu0 %v507
        %v509 = vpop.xlane.xlu0 %508
        %v510 = vsub.f32 %v502, %v509
        %v511 = vmul.f32 %v510, 1.442695
        %v512 = vpow.pop %v511
        %v513 = vsel %vm345, %v512, 0.0
        %514 = vadd.xlane.f32.xlu0 %v513
        %v515 = vpop.xlane.xlu0 %514
        %v516 = vrcp.pop %v515
        %v517 = vmul.f32 %v512, %v516
        %v518 = vpack.c.bf16 %v517, %v517
        %519 = vrot.lane.b32.xlu0 %v455, 88
        %v520 = vpop.permute.xlu0 %519
        %v522 = vsel %vm345, %v518, 0
        %v525 = vsel %vm409, %v520, 0
        %527 = vmatprep.subr.bf16.mxu0 0
        %528 = vmatpush1.bf16.msra.mxu0 %v525
        %529 = vmatprep.subr.bf16.mxu0 0
        %530 = vmatpush1.bf16.msra.mxu0 0
        %531 = vmatprep.subr.bf16.mxu0 0
        %532 = vmatpush1.bf16.msra.mxu0 0
        %533 = vmatprep.subr.bf16.mxu0 0
        %534 = vmatpush1.bf16.msra.mxu0 0
        %535 = vmatprep.subr.bf16.mxu0 0
        %536 = vmatpush1.bf16.msra.mxu0 0
        %537 = vmatprep.subr.bf16.mxu0 0
        %538 = vmatpush1.bf16.msra.mxu0 0
        %539 = vmatprep.subr.bf16.mxu0 0
        %540 = vmatpush1.bf16.msra.mxu0 0
        %541 = vmatprep.subr.bf16.mxu0 0
        %542 = vmatpush1.bf16.msra.mxu0 0
        %543 = vmatprep.subr.bf16.mxu0 0
        %544 = vmatpush1.bf16.msra.mxu0 0
        %545 = vmatprep.subr.bf16.mxu0 0
        %546 = vmatpush1.bf16.msra.mxu0 0
        %547 = vmatprep.subr.bf16.mxu0 0
        %548 = vmatpush1.bf16.msra.mxu0 0
        %549 = vmatprep.subr.bf16.mxu0 0
        %550 = vmatpush1.bf16.msra.mxu0 0
        %551 = vmatprep.subr.bf16.mxu0 0
        %552 = vmatpush1.bf16.msra.mxu0 0
        %553 = vmatprep.subr.bf16.mxu0 0
        %554 = vmatpush1.bf16.msra.mxu0 0
        %555 = vmatprep.subr.bf16.mxu0 0
        %556 = vmatpush1.bf16.msra.mxu0 0
        %557 = vmatprep.subr.bf16.mxu0 0
        %558 = vmatpush1.bf16.msra.mxu0 0
        %559 = vmatprep.mubr.bf16.mxu0 0
        %560 = vmatmul.mubr.bf16.gmra.mrb[0].mxu0 %v522
        %v561 = vpop.f32.mrb[0].mxu0
        %v562 = vadd.f32 0.0, %v561
        %v563 = vpop.f32.mrb[0].mxu0
        %v564 = vpop.f32.mrb[0].mxu0
        %v565 = vpop.f32.mrb[0].mxu0
        %566 = vdwg.mxu0
        %568 = vrot.lane.b32.xlu0 %v562, 8
        %v569 = vpop.permute.xlu0 %568
        %vm571 = vcmask 130112
        %572 = vst.msk [vmem:[#allocation3] sm:$0xff] %vm571, %v569
        %v573 = vld [vmem:[#allocation2] sm:$0xff]
        %v574 = vpack.c.bf16 %v573, %v573
        %576 = vrot.lane.b32.xlu0 %v574, 80
        %v577 = vpop.permute.xlu0 %576
        %578 = vrot.lane.b32.xlu0 %v574, 72
        %v579 = vpop.permute.xlu0 %578
        %v581 = vsel %vm345, %v577, 0
        %v584 = vsel %vm345, %v579, 0
        %586 = vmatprep.subr.bf16.mxu0 0
        %587 = vmatpush1.bf16.xpose.msra.mxu0 %v584
        %588 = vmatprep.subr.bf16.mxu0 0
        %589 = vmatpush1.bf16.xpose.msra.mxu0 0
        %590 = vmatprep.subr.bf16.mxu0 0
        %591 = vmatpush1.bf16.xpose.msra.mxu0 0
        %592 = vmatprep.subr.bf16.mxu0 0
        %593 = vmatpush1.bf16.xpose.msra.mxu0 0
        %594 = vmatprep.subr.bf16.mxu0 0
        %595 = vmatpush1.bf16.xpose.msra.mxu0 0
        %596 = vmatprep.subr.bf16.mxu0 0
        %597 = vmatpush1.bf16.xpose.msra.mxu0 0
        %598 = vmatprep.subr.bf16.mxu0 0
        %599 = vmatpush1.bf16.xpose.msra.mxu0 0
        %600 = vmatprep.subr.bf16.mxu0 0
        %601 = vmatpush1.bf16.xpose.msra.mxu0 0
        %602 = vmatprep.subr.bf16.mxu0 0
        %603 = vmatpush1.bf16.xpose.msra.mxu0 0
        %604 = vmatprep.subr.bf16.mxu0 0
        %605 = vmatpush1.bf16.xpose.msra.mxu0 0
        %606 = vmatprep.subr.bf16.mxu0 0
        %607 = vmatpush1.bf16.xpose.msra.mxu0 0
        %608 = vmatprep.subr.bf16.mxu0 0
        %609 = vmatpush1.bf16.xpose.msra.mxu0 0
        %610 = vmatprep.subr.bf16.mxu0 0
        %611 = vmatpush1.bf16.xpose.msra.mxu0 0
        %612 = vmatprep.subr.bf16.mxu0 0
        %613 = vmatpush1.bf16.xpose.msra.mxu0 0
        %614 = vmatprep.subr.bf16.mxu0 0
        %615 = vmatpush1.bf16.xpose.msra.mxu0 0
        %616 = vmatprep.subr.bf16.mxu0 0
        %617 = vmatpush1.bf16.xpose.msra.mxu0 0
        %618 = vmatprep.mubr.bf16.mxu0 0
        %619 = vmatmul.mubr.bf16.gmra.mrb[0].mxu0 %v581
        %v620 = vpop.f32.mrb[0].mxu0
        %v621 = vadd.f32 0.0, %v620
        %v622 = vpop.f32.mrb[0].mxu0
        %v623 = vpop.f32.mrb[0].mxu0
        %v624 = vpop.f32.mrb[0].mxu0
        %625 = vdwg.mxu0
        %v626 = vsel %vm345, %v621, -inf
        %627 = vmax.xlane.f32.xlu0 %v626
        %v628 = vpop.xlane.xlu0 %627
        %v629 = vsub.f32 %v621, %v628
        %v630 = vmul.f32 %v629, 1.442695
        %v631 = vpow.pop %v630
        %v632 = vsel %vm345, %v631, 0.0
        %633 = vadd.xlane.f32.xlu0 %v632
        %v634 = vpop.xlane.xlu0 %633
        %v635 = vrcp.pop %v634
        %v636 = vmul.f32 %v631, %v635
        %v637 = vpack.c.bf16 %v636, %v636
        %638 = vrot.lane.b32.xlu0 %v574, 64
        %v639 = vpop.permute.xlu0 %638
        %v641 = vsel %vm345, %v637, 0
        %v644 = vsel %vm409, %v639, 0
        %646 = vmatprep.subr.bf16.mxu0 0
        %647 = vmatpush1.bf16.msra.mxu0 %v644
        %648 = vmatprep.subr.bf16.mxu0 0
        %649 = vmatpush1.bf16.msra.mxu0 0
        %650 = vmatprep.subr.bf16.mxu0 0
        %651 = vmatpush1.bf16.msra.mxu0 0
        %652 = vmatprep.subr.bf16.mxu0 0
        %653 = vmatpush1.bf16.msra.mxu0 0
        %654 = vmatprep.subr.bf16.mxu0 0
        %655 = vmatpush1.bf16.msra.mxu0 0
        %656 = vmatprep.subr.bf16.mxu0 0
        %657 = vmatpush1.bf16.msra.mxu0 0
        %658 = vmatprep.subr.bf16.mxu0 0
        %659 = vmatpush1.bf16.msra.mxu0 0
        %660 = vmatprep.subr.bf16.mxu0 0
        %661 = vmatpush1.bf16.msra.mxu0 0
        %662 = vmatprep.subr.bf16.mxu0 0
        %663 = vmatpush1.bf16.msra.mxu0 0
        %664 = vmatprep.subr.bf16.mxu0 0
        %665 = vmatpush1.bf16.msra.mxu0 0
        %666 = vmatprep.subr.bf16.mxu0 0
        %667 = vmatpush1.bf16.msra.mxu0 0
        %668 = vmatprep.subr.bf16.mxu0 0
        %669 = vmatpush1.bf16.msra.mxu0 0
        %670 = vmatprep.subr.bf16.mxu0 0
        %671 = vmatpush1.bf16.msra.mxu0 0
        %672 = vmatprep.subr.bf16.mxu0 0
        %673 = vmatpush1.bf16.msra.mxu0 0
        %674 = vmatprep.subr.bf16.mxu0 0
        %675 = vmatpush1.bf16.msra.mxu0 0
        %676 = vmatprep.subr.bf16.mxu0 0
        %677 = vmatpush1.bf16.msra.mxu0 0
        %678 = vmatprep.mubr.bf16.mxu0 0
        %679 = vmatmul.mubr.bf16.gmra.mrb[0].mxu0 %v641
        %v680 = vpop.f32.mrb[0].mxu0
        %v681 = vadd.f32 0.0, %v680
        %v682 = vpop.f32.mrb[0].mxu0
        %v683 = vpop.f32.mrb[0].mxu0
        %v684 = vpop.f32.mrb[0].mxu0
        %685 = vdwg.mxu0
        %687 = vrot.lane.b32.xlu0 %v681, 16
        %v688 = vpop.permute.xlu0 %687
        %vm690 = vcmask 195712
        %691 = vst.msk [vmem:[#allocation3] sm:$0xff] %vm690, %v688
        %v692 = vld [vmem:[#allocation2] sm:$0xff]
        %v693 = vpack.c.bf16 %v692, %v692
        %695 = vrot.lane.b32.xlu0 %v693, 56
        %v696 = vpop.permute.xlu0 %695
        %697 = vrot.lane.b32.xlu0 %v693, 48
        %v698 = vpop.permute.xlu0 %697
        %v700 = vsel %vm345, %v696, 0
        %v703 = vsel %vm345, %v698, 0
        %705 = vmatprep.subr.bf16.mxu0 0
        %706 = vmatpush1.bf16.xpose.msra.mxu0 %v703
        %707 = vmatprep.subr.bf16.mxu0 0
        %708 = vmatpush1.bf16.xpose.msra.mxu0 0
        %709 = vmatprep.subr.bf16.mxu0 0
        %710 = vmatpush1.bf16.xpose.msra.mxu0 0
        %711 = vmatprep.subr.bf16.mxu0 0
        %712 = vmatpush1.bf16.xpose.msra.mxu0 0
        %713 = vmatprep.subr.bf16.mxu0 0
        %714 = vmatpush1.bf16.xpose.msra.mxu0 0
        %715 = vmatprep.subr.bf16.mxu0 0
        %716 = vmatpush1.bf16.xpose.msra.mxu0 0
        %717 = vmatprep.subr.bf16.mxu0 0
        %718 = vmatpush1.bf16.xpose.msra.mxu0 0
        %719 = vmatprep.subr.bf16.mxu0 0
        %720 = vmatpush1.bf16.xpose.msra.mxu0 0
        %721 = vmatprep.subr.bf16.mxu0 0
        %722 = vmatpush1.bf16.xpose.msra.mxu0 0
        %723 = vmatprep.subr.bf16.mxu0 0
        %724 = vmatpush1.bf16.xpose.msra.mxu0 0
        %725 = vmatprep.subr.bf16.mxu0 0
        %726 = vmatpush1.bf16.xpose.msra.mxu0 0
        %727 = vmatprep.subr.bf16.mxu0 0
        %728 = vmatpush1.bf16.xpose.msra.mxu0 0
        %729 = vmatprep.subr.bf16.mxu0 0
        %730 = vmatpush1.bf16.xpose.msra.mxu0 0
        %731 = vmatprep.subr.bf16.mxu0 0
        %732 = vmatpush1.bf16.xpose.msra.mxu0 0
        %733 = vmatprep.subr.bf16.mxu0 0
        %734 = vmatpush1.bf16.xpose.msra.mxu0 0
        %735 = vmatprep.subr.bf16.mxu0 0
        %736 = vmatpush1.bf16.xpose.msra.mxu0 0
        %737 = vmatprep.mubr.bf16.mxu0 0
        %738 = vmatmul.mubr.bf16.gmra.mrb[0].mxu0 %v700
        %v739 = vpop.f32.mrb[0].mxu0
        %v740 = vadd.f32 0.0, %v739
        %v741 = vpop.f32.mrb[0].mxu0
        %v742 = vpop.f32.mrb[0].mxu0
        %v743 = vpop.f32.mrb[0].mxu0
        %744 = vdwg.mxu0
        %v745 = vsel %vm345, %v740, -inf
        %746 = vmax.xlane.f32.xlu0 %v745
        %v747 = vpop.xlane.xlu0 %746
        %v748 = vsub.f32 %v740, %v747
        %v749 = vmul.f32 %v748, 1.442695
        %v750 = vpow.pop %v749
        %v751 = vsel %vm345, %v750, 0.0
        %752 = vadd.xlane.f32.xlu0 %v751
        %v753 = vpop.xlane.xlu0 %752
        %v754 = vrcp.pop %v753
        %v755 = vmul.f32 %v750, %v754
        %v756 = vpack.c.bf16 %v755, %v755
        %757 = vrot.lane.b32.xlu0 %v693, 40
        %v758 = vpop.permute.xlu0 %757
        %v760 = vsel %vm345, %v756, 0
        %v763 = vsel %vm409, %v758, 0
        %765 = vmatprep.subr.bf16.mxu0 0
        %766 = vmatpush1.bf16.msra.mxu0 %v763
        %767 = vmatprep.subr.bf16.mxu0 0
        %768 = vmatpush1.bf16.msra.mxu0 0
        %769 = vmatprep.subr.bf16.mxu0 0
        %770 = vmatpush1.bf16.msra.mxu0 0
        %771 = vmatprep.subr.bf16.mxu0 0
        %772 = vmatpush1.bf16.msra.mxu0 0
        %773 = vmatprep.subr.bf16.mxu0 0
        %774 = vmatpush1.bf16.msra.mxu0 0
        %775 = vmatprep.subr.bf16.mxu0 0
        %776 = vmatpush1.bf16.msra.mxu0 0
        %777 = vmatprep.subr.bf16.mxu0 0
        %778 = vmatpush1.bf16.msra.mxu0 0
        %779 = vmatprep.subr.bf16.mxu0 0
        %780 = vmatpush1.bf16.msra.mxu0 0
        %781 = vmatprep.subr.bf16.mxu0 0
        %782 = vmatpush1.bf16.msra.mxu0 0
        %783 = vmatprep.subr.bf16.mxu0 0
        %784 = vmatpush1.bf16.msra.mxu0 0
        %785 = vmatprep.subr.bf16.mxu0 0
        %786 = vmatpush1.bf16.msra.mxu0 0
        %787 = vmatprep.subr.bf16.mxu0 0
        %788 = vmatpush1.bf16.msra.mxu0 0
        %789 = vmatprep.subr.bf16.mxu0 0
        %790 = vmatpush1.bf16.msra.mxu0 0
        %791 = vmatprep.subr.bf16.mxu0 0
        %792 = vmatpush1.bf16.msra.mxu0 0
        %793 = vmatprep.subr.bf16.mxu0 0
        %794 = vmatpush1.bf16.msra.mxu0 0
        %795 = vmatprep.subr.bf16.mxu0 0
        %796 = vmatpush1.bf16.msra.mxu0 0
        %797 = vmatprep.mubr.bf16.mxu0 0
        %798 = vmatmul.mubr.bf16.gmra.mrb[0].mxu0 %v760
        %v799 = vpop.f32.mrb[0].mxu0
        %v800 = vadd.f32 0.0, %v799
        %v801 = vpop.f32.mrb[0].mxu0
        %v802 = vpop.f32.mrb[0].mxu0
        %v803 = vpop.f32.mrb[0].mxu0
        %804 = vdwg.mxu0
        %806 = vrot.lane.b32.xlu0 %v800, 24
        %v807 = vpop.permute.xlu0 %806
        %vm809 = vcmask 261312
        %810 = vst.msk [vmem:[#allocation3] sm:$0xff] %vm809, %v807
        %v811 = vld [vmem:[#allocation3] sm:$0xff]
        %v812 = vpack.c.bf16 %v811, %v811
        %v813 = vld [vmem:[#allocation9] sm:$0xf]
        %v814 = vld [vmem:[#allocation9 + $0x4] sm:$0xf]
        %v815 = vld [vmem:[#allocation9 + $0x8] sm:$0xf]
        %v816 = vld [vmem:[#allocation9 + $0xc] sm:$0xf]
        %v817 = vld [vmem:[%s4] sm:$0x1]
        %v819 = vlaneseq
        %v820 = vshrl.u32 %v819, 7
        %v821 = vsub.s32 0, %v820
        %v822 = vrot.slane %v817, %v821
        %v828 = vunpack.c.l.b16 %v813
        %v829 = vunpack.c.l.b16 %v814
        %v830 = vunpack.c.l.b16 %v815
        %v831 = vunpack.c.l.b16 %v816
        %v832 = vpack.c.b16 %v829, %v828
        %v833 = vpack.c.b16 %v831, %v830
        %v837 = vsel %vm294, %v812, 0
        %839 = vmatprep.subr.bf16.mxu0 0
        %840 = vmatpush1.bf16.msra.mxu0 %v832
        %841 = vmatprep.subr.bf16.mxu0 0
        %842 = vmatpush1.bf16.msra.mxu0 %v833
        %843 = vmatprep.subr.bf16.mxu0 0
        %844 = vmatpush1.bf16.msra.mxu0 0
        %845 = vmatprep.subr.bf16.mxu0 0
        %846 = vmatpush1.bf16.msra.mxu0 0
        %847 = vmatprep.subr.bf16.mxu0 0
        %848 = vmatpush1.bf16.msra.mxu0 0
        %849 = vmatprep.subr.bf16.mxu0 0
        %850 = vmatpush1.bf16.msra.mxu0 0
        %851 = vmatprep.subr.bf16.mxu0 0
        %852 = vmatpush1.bf16.msra.mxu0 0
        %853 = vmatprep.subr.bf16.mxu0 0
        %854 = vmatpush1.bf16.msra.mxu0 0
        %855 = vmatprep.subr.bf16.mxu0 0
        %856 = vmatpush1.bf16.msra.mxu0 0
        %857 = vmatprep.subr.bf16.mxu0 0
        %858 = vmatpush1.bf16.msra.mxu0 0
        %859 = vmatprep.subr.bf16.mxu0 0
        %860 = vmatpush1.bf16.msra.mxu0 0
        %861 = vmatprep.subr.bf16.mxu0 0
        %862 = vmatpush1.bf16.msra.mxu0 0
        %863 = vmatprep.subr.bf16.mxu0 0
        %864 = vmatpush1.bf16.msra.mxu0 0
        %865 = vmatprep.subr.bf16.mxu0 0
        %866 = vmatpush1.bf16.msra.mxu0 0
        %867 = vmatprep.subr.bf16.mxu0 0
        %868 = vmatpush1.bf16.msra.mxu0 0
        %869 = vmatprep.subr.bf16.mxu0 0
        %870 = vmatpush1.bf16.msra.mxu0 0
        %871 = vmatprep.mubr.bf16.mxu0 0
        %872 = vmatmul.mubr.bf16.gmra.mrb[0].mxu0 %v837
        %v873 = vpop.f32.mrb[0].mxu0
        %v874 = vadd.f32 %v822, %v873
        %v875 = vpop.f32.mrb[0].mxu0
        %v876 = vpop.f32.mrb[0].mxu0
        %v877 = vpop.f32.mrb[0].mxu0
        %878 = vdwg.mxu0
        %879 = vst.msk [vmem:[%s268] sm:$0xff] %vm294, %v874
        %s880 = sand.u32 %s141, 1
        %s881 = scalar_lea.sflag [#allocation6], %s880
        %s882 = sand.u32 %s141, 1
        %s883 = smul.addr %s882, 8
        %s884 = scalar_lea.vmem [#allocation10], %s883
        // Predicated region
        $region53: #{tpu_custom_call.1} parent=39 // pred_check
          %p885 = pneg %p151
        $region54: #{tpu_custom_call.1} parent=39 // pred_check_branch
          %887 = sbr.rel (%p885) target = $region56
        $region55: #{tpu_custom_call.1} parent=39 // pred_region
          %s889 = ssub.s32 128, 128
          %890 = vsyncadd %s881, %s889
          %s891 = smul.addr %s23, 128
          %s892 = scalar_lea.hbm %s5, %s891
          %s894 = sshll.u32 %s884, 4
          %s895 = int_to_ptr.vmem [resolvable:$true] %s894
          %897 = dma.vmem_to_hbm [thread:$0]  %s895, 128, %s892, %s881
        $region56: #{tpu_custom_call.1} parent=39 // pred_fallthru
          _
      $region40: #{tpu_custom_call.1} parent=5 // pred_fallthru
        _
      %p898 = scmp.le.s32.totalorder 2, %s18
      // Predicated region
      $region57: #{tpu_custom_call.1} parent=5 // pred_check
        %p899 = pneg %p898
      $region58: #{tpu_custom_call.1} parent=5 // pred_check_branch
        %901 = sbr.rel (%p899) target = $region60
      $region59: #{tpu_custom_call.1} parent=5 // pred_region
        %s902 = ssub.s32 %s18, 2
        // Predicated region
        $region61: #{tpu_custom_call.1} parent=59 // pred_check
          %p903 = pneg %p157
        $region62: #{tpu_custom_call.1} parent=59 // pred_check_branch
          %905 = sbr.rel (%p903) target = $region64
        $region63: #{tpu_custom_call.1} parent=59 // pred_region
          %s906 = sand.u32 %s142, 1
          %s907 = scalar_lea.sflag [#allocation6], %s906
          %s908 = sand.u32 %s142, 1
          %s909 = smul.addr %s908, 8
          %s910 = scalar_lea.vmem [#allocation10], %s909
          %911 = dma.done %s907, 128
        $region64: #{tpu_custom_call.1} parent=59 // pred_fallthru
          _
      $region60: #{tpu_custom_call.1} parent=5 // pred_fallthru
        _
    $region6: #{tpu_custom_call.1} parent=1 // loop_footer
      %s22 = sadd.s32 1, %s18
    $region7: #{tpu_custom_call.1} parent=1 // loop_footer_branch
      %17 = sbr.rel target = $region3
    $region8: #{tpu_custom_call.1} parent=1 // loop_exit
      _
    %912 = vsyncpa [#allocation5], 1
    %s913 = scalar_lea.sflag [#allocation5], 1
    %914 = vsyncpa %s913, 1
    %915 = vsyncpa [#allocation8], 1
    %916 = vsyncpa [#allocation6], 1
    %s917 = scalar_lea.sflag [#allocation6], 1
    %918 = vsyncpa %s917, 1

</llo_original>
